<compile_context>
chip_gen: v7x
topology: tpu7x:2x2x1
jax: 0.10.0
libtpu: 0.0.40
codegen_flags: <defaults>
</compile_context>

<pallas_src>
import functools

import numpy as np
import jax
import jax.numpy as jnp
from jax.experimental import pallas as pl
from jax.experimental.pallas import tpu as pltpu

NTRANS = 3   # the reference module hard-codes range(3) transitions
NCH = 2      # channels: 0 = light, 1 = heavy


def _round_up(x, m):
    return ((x + m - 1) // m) * m


def _transition_select_kernel(rt_idx_ref, qual_ref, xic_ref, new_xic_ref, sel_ref):
    """One grid step = one tile of `tb` samples.

    xic_ref     : (6, tb, T) f32, rows = [light_t1..t3, heavy_t1..t3]; each row
                  is a contiguous lane-dense (tb, T) slab.
    rt_idx_ref  : (tb, 1) int32 precomputed (clamped) rt index per sample.
    qual_ref    : (tb, 3) f32, 1.0 where transition is qualified else 0.0.
    new_xic_ref : (2, tb, T) f32 selected transition (light & heavy channel).
    sel_ref     : (tb, 1) int32 selected transition index per sample.
    """
    tb = xic_ref.shape[1]
    T = xic_ref.shape[2]
    neg = jnp.float32(-3.0e38)   # finite "-inf" sentinel

    # One-hot lane mask at the retention-time index (shared by all transitions).
    rt_idx = rt_idx_ref[...]                                        # (tb, 1)
    lane = jax.lax.broadcasted_iota(jnp.int32, (tb, T), 1)
    onehot = lane == rt_idx                                         # (tb, T)

    qual = qual_ref[...]                                            # (tb, 3)

    # peak_heights = xic[heavy, j, rt_index], masked by qualification,
    # vectorized over the whole tile.
    def masked_peak(j):
        heavy_j = xic_ref[NTRANS + j]                               # (tb, T)
        pk = jnp.sum(jnp.where(onehot, heavy_j, 0.0), axis=1, keepdims=True)
        return jnp.where(qual[:, j:j + 1] > 0.5, pk, neg)           # (tb, 1)

    ph0 = masked_peak(0)
    ph1 = masked_peak(1)
    ph2 = masked_peak(2)

    # First-occurrence argmax over the 3 candidates (pure VPU vselects).
    sel = jnp.zeros((tb, 1), jnp.int32)
    best = ph0
    sel = jnp.where(ph1 > best, jnp.int32(1), sel)
    best = jnp.maximum(ph1, best)
    sel = jnp.where(ph2 > best, jnp.int32(2), sel)
    sel_ref[...] = sel

    # new_xic[c] = xic[c, sel, :] via a 2-deep vselect chain (no iota / XLU sum).
    is0 = sel == 0
    is1 = sel == 1
    for c in range(NCH):
        r = c * NTRANS
        new_xic_ref[c] = jnp.where(
            is0, xic_ref[r],
            jnp.where(is1, xic_ref[r + 1], xic_ref[r + 2]))


@functools.partial(jax.jit, static_argnames=("p", "tile_b"))
def transition_select(xic, time, rt, replicate_id, quality, auc,
                      manual_quality, rand_vals, p=0.5, tile_b=128):
    """Batched TransitionSelect.

    Args:
      xic: (B, 2, 3, T) float; time: (B, T); rt/replicate_id/manual_quality/
      rand_vals: (B,); quality/auc: (B, 3).
    Returns:
      new_xic: (B, 2, 1, T) float32 (the selection, valid when applied == 1)
      meta   : (B, 3) int32  = [applied, selected_transition (or -1), manual_quality]
    """
    B, C, NT, T = xic.shape
    assert C == NCH and NT == NTRANS
    xic = xic.astype(jnp.float32)
    time = time.astype(jnp.float32)
    rt = rt.astype(jnp.float32)

    # ---- scalar bookkeeping in the wrapper (no SMEM traffic, no in-kernel scalars) ----
    t0 = time[:, 0]
    tN = time[:, T - 1]
    frac = (rt - t0) / (tN - t0)
    # int() truncates toward zero, as does astype(int32).
    # TODO(synk): PyTorch does this scalar math in float64; at exact bin
    #             boundaries the f32 truncation may differ by one index.
    rt_index = jnp.minimum((jnp.float32(T) * frac).astype(jnp.int32), T - 1)
    eff_idx = jnp.where(rt_index < 0, rt_index + T, rt_index)   # torch negative-index wrap
    # TODO(synk): torch raises IndexError when rt_index < -T; with static shapes we clamp.
    eff_idx = jnp.clip(eff_idx, 0, T - 1).astype(jnp.int32).reshape(B, 1)

    qual = jnp.logical_and(quality == 1.0,
                           jnp.logical_not(jnp.isnan(auc))).astype(jnp.float32)  # (B, 3)
    any_q = jnp.any(qual > 0.5, axis=1)
    applied = (rand_vals <= p) & (replicate_id != 0) & any_q

    # ---- pack xic so each (channel, transition) row is a lane-dense (tb, T) slab ----
    xic_packed = xic.reshape(B, NCH * NTRANS, T).transpose(1, 0, 2)   # (6, B, T)

    tb = max(8, min(int(tile_b), _round_up(B, 8)))
    tb = _round_up(tb, 8)
    b_pad = _round_up(B, tb)
    if b_pad != B:
        pad = b_pad - B
        xic_packed = jnp.pad(xic_packed, ((0, 0), (0, pad), (0, 0)))
        eff_idx = jnp.pad(eff_idx, ((0, pad), (0, 0)))
        qual = jnp.pad(qual, ((0, pad), (0, 0)))

    # VMEM: ~(6+2)*tb*T*4 B double-buffered; tb=128, T<=4k stays far below the
    # 32 MiB scoped default on v5e/v6e/v7x, so no vmem_limit override is needed.
    new_xic_p, sel = pl.pallas_call(
        _transition_select_kernel,
        out_shape=(jax.ShapeDtypeStruct((NCH, b_pad, T), jnp.float32),
                   jax.ShapeDtypeStruct((b_pad, 1), jnp.int32)),
        grid_spec=pltpu.PrefetchScalarGridSpec(
            num_scalar_prefetch=0,
            grid=(b_pad // tb,),
            in_specs=[pl.BlockSpec((tb, 1), lambda i: (i, 0)),
                      pl.BlockSpec((tb, NTRANS), lambda i: (i, 0)),
                      pl.BlockSpec((NCH * NTRANS, tb, T), lambda i: (0, i, 0))],
            out_specs=(pl.BlockSpec((NCH, tb, T), lambda i: (0, i, 0)),
                       pl.BlockSpec((tb, 1), lambda i: (i, 0)))),
        compiler_params=pltpu.CompilerParams(
            dimension_semantics=("parallel",)),   # batch axis -> both TCs on v7x
    )(eff_idx, qual, xic_packed)

    new_xic = new_xic_p.transpose(1, 0, 2)[:B].reshape(B, NCH, 1, T)
    sel_b = sel[:B, 0]
    meta = jnp.stack([applied.astype(jnp.int32),
                      jnp.where(applied, sel_b, jnp.int32(-1)),
                      jnp.where(applied, jnp.int32(1),
                                manual_quality.astype(jnp.int32))], axis=1)
    return new_xic, meta


def _numpy_reference(xic, time, rt, rep_id, quality, auc, rand_val, p):
    """Mirrors the PyTorch forward for one sample (None == sample returned unchanged)."""
    if rand_val > p or rep_id == 0:
        return None
    T = len(time)
    frac = (np.float32(rt) - np.float32(time[0])) / (np.float32(time[-1]) - np.float32(time[0]))
    rt_index = min(int(np.float32(T) * frac), T - 1)
    qidx = np.array([j for j in range(3)
                     if quality[j] == 1 and not np.isnan(auc[j])])
    if len(qidx) == 0:
        return None
    peak_heights = xic[1, qidx, rt_index]
    sel = int(qidx[int(np.argmax(peak_heights))])
    return xic[:, [sel], :], sel


if __name__ == "__main__":
    key = jax.random.PRNGKey(0)
    B, T = 8, 128
    xic = jnp.abs(jax.random.normal(key, (B, NCH, NTRANS, T), dtype=jnp.float32)) + 0.1
    time = jnp.tile(jnp.linspace(0.0, 10.0, T, dtype=jnp.float32)[None, :], (B, 1))
    rt = jnp.array([6.3, 2.1, 8.7, 4.4, 1.2, 9.1, 5.5, 3.3], jnp.float32)
    replicate_id = jnp.array([1., 0., 2., 1., 1., 3., 1., 1.], jnp.float32)
    rand_vals = jnp.array([0.1, 0.2, 0.9, 0.3, 0.4, 0.1, 0.7, 0.2], jnp.float32)  # torch.rand(1) stand-ins
    quality = jnp.array([[1, 0, 1], [1, 1, 1], [1, 1, 1], [0, 0, 0],
                         [1, 1, 1], [1, 0, 1], [1, 1, 0], [0, 1, 1]], jnp.float32)
    auc = jnp.array([[12.5, np.nan, 7.1],
                     [1.0, 2.0, 3.0],
                     [4.0, 5.0, 6.0],
                     [1.0, 1.0, 1.0],
                     [np.nan, np.nan, 5.0],
                     [3.0, 1.0, np.nan],
                     [2.0, 8.0, 1.0],
                     [np.nan, 4.0, 9.0]], jnp.float32)
    manual_quality = jnp.zeros((B,), jnp.float32)
    p = 0.5

    new_xic, meta = transition_select(xic, time, rt, replicate_id, quality,
                                      auc, manual_quality, rand_vals,
                                      p=p, tile_b=128)
    new_xic = jax.block_until_ready(new_xic)
    meta = jax.block_until_ready(meta)

    xic_np = np.asarray(xic)
    time_np = np.asarray(time)
    quality_np = np.asarray(quality)
    auc_np = np.asarray(auc)
    rt_np = np.asarray(rt)
    rep_np = np.asarray(replicate_id)
    rand_np = np.asarray(rand_vals)
    meta_np = np.asarray(meta)
    new_np = np.asarray(new_xic)

    for b in range(B):
        ref = _numpy_reference(xic_np[b], time_np[b], float(rt_np[b]),
                               float(rep_np[b]), quality_np[b], auc_np[b],
                               float(rand_np[b]), p)
        applied_b, sel_b, mq_b = int(meta_np[b, 0]), int(meta_np[b, 1]), int(meta_np[b, 2])
        if ref is None:
            assert applied_b == 0, (b, applied_b)
            assert sel_b == -1 and mq_b == 0, (b, sel_b, mq_b)
        else:
            ref_xic, ref_sel = ref
            assert applied_b == 1 and sel_b == ref_sel and mq_b == 1, (b, sel_b, ref_sel)
            np.testing.assert_allclose(new_np[b], ref_xic, rtol=1e-6, atol=1e-6)

    print("KERNEL_OK")
</pallas_src>

<mosaic_0001>
module attributes {stable_mosaic.version = 11 : i64} {
  func.func @_transition_select_kernel(%arg0: i32, %arg1: memref<8x1xi32, #tpu.memory_space<vmem>>, %arg2: memref<8x3xf32, #tpu.memory_space<vmem>>, %arg3: memref<6x8x128xf32, #tpu.memory_space<vmem>>, %arg4: memref<2x8x128xf32, #tpu.memory_space<vmem>>, %arg5: memref<8x1xi32, #tpu.memory_space<vmem>>) attributes {dimension_semantics = [#tpu.dimension_semantics<parallel>], iteration_bounds = array<i64: 1>, scalar_prefetch = 0 : i64, scratch_operands = 0 : i64, tpu.core_type = #tpu.core_type<tc>, window_params = [{transform_indices = @transform_0, window_bounds = array<i64: 8, 1>}, {transform_indices = @transform_1, window_bounds = array<i64: 8, 3>}, {transform_indices = @transform_2, window_bounds = array<i64: 6, 8, 128>}, {transform_indices = @transform_3, window_bounds = array<i64: 2, 8, 128>}, {transform_indices = @transform_4, window_bounds = array<i64: 8, 1>}]} {
    %c0 = arith.constant 0 : index
    %c0_0 = arith.constant 0 : index
    %0 = vector.load %arg1[%c0, %c0_0] : memref<8x1xi32, #tpu.memory_space<vmem>>, vector<8x1xi32>
    %1 = tpu.iota {dimensions = array<i32: 1>} : vector<8x128xi32>
    %2 = vector.broadcast %0 : vector<8x1xi32> to vector<8x128xi32>
    %3 = arith.cmpi eq, %1, %2 : vector<8x128xi32>
    %c0_1 = arith.constant 0 : index
    %c0_2 = arith.constant 0 : index
    %4 = vector.load %arg2[%c0_1, %c0_2] : memref<8x3xf32, #tpu.memory_space<vmem>>, vector<8x3xf32>
    %c3 = arith.constant 3 : index
    %c0_3 = arith.constant 0 : index
    %c0_4 = arith.constant 0 : index
    %5 = vector.load %arg3[%c3, %c0_3, %c0_4] : memref<6x8x128xf32, #tpu.memory_space<vmem>>, vector<1x8x128xf32>
    %6 = vector.shape_cast %5 : vector<1x8x128xf32> to vector<8x128xf32>
    %cst = arith.constant 0.000000e+00 : f32
    %7 = vector.broadcast %cst : f32 to vector<8x128xf32>
    %8 = arith.select %3, %6, %7 : vector<8x128xi1>, vector<8x128xf32>
    %cst_5 = arith.constant dense<0.000000e+00> : vector<8xf32>
    %9 = vector.multi_reduction <add>, %8, %cst_5 [1] : vector<8x128xf32> to vector<8xf32>
    %10 = vector.shape_cast %9 : vector<8xf32> to vector<8x1xf32>
    %11 = vector.extract_strided_slice %4 {offsets = [0, 0], sizes = [8, 1], strides = [1, 1]} : vector<8x3xf32> to vector<8x1xf32>
    %cst_6 = arith.constant 5.000000e-01 : f32
    %12 = vector.broadcast %cst_6 : f32 to vector<8x1xf32>
    %13 = arith.cmpf ogt, %11, %12 : vector<8x1xf32>
    %cst_7 = arith.constant -3.000000e+38 : f32
    %14 = vector.broadcast %cst_7 : f32 to vector<8x1xf32>
    %15 = arith.select %13, %10, %14 : vector<8x1xi1>, vector<8x1xf32>
    %c4 = arith.constant 4 : index
    %c0_8 = arith.constant 0 : index
    %c0_9 = arith.constant 0 : index
    %16 = vector.load %arg3[%c4, %c0_8, %c0_9] : memref<6x8x128xf32, #tpu.memory_space<vmem>>, vector<1x8x128xf32>
    %17 = vector.shape_cast %16 : vector<1x8x128xf32> to vector<8x128xf32>
    %cst_10 = arith.constant 0.000000e+00 : f32
    %18 = vector.broadcast %cst_10 : f32 to vector<8x128xf32>
    %19 = arith.select %3, %17, %18 : vector<8x128xi1>, vector<8x128xf32>
    %cst_11 = arith.constant dense<0.000000e+00> : vector<8xf32>
    %20 = vector.multi_reduction <add>, %19, %cst_11 [1] : vector<8x128xf32> to vector<8xf32>
    %21 = vector.shape_cast %20 : vector<8xf32> to vector<8x1xf32>
    %22 = vector.extract_strided_slice %4 {offsets = [0, 1], sizes = [8, 1], strides = [1, 1]} : vector<8x3xf32> to vector<8x1xf32>
    %cst_12 = arith.constant 5.000000e-01 : f32
    %23 = vector.broadcast %cst_12 : f32 to vector<8x1xf32>
    %24 = arith.cmpf ogt, %22, %23 : vector<8x1xf32>
    %cst_13 = arith.constant -3.000000e+38 : f32
    %25 = vector.broadcast %cst_13 : f32 to vector<8x1xf32>
    %26 = arith.select %24, %21, %25 : vector<8x1xi1>, vector<8x1xf32>
    %c5 = arith.constant 5 : index
    %c0_14 = arith.constant 0 : index
    %c0_15 = arith.constant 0 : index
    %27 = vector.load %arg3[%c5, %c0_14, %c0_15] : memref<6x8x128xf32, #tpu.memory_space<vmem>>, vector<1x8x128xf32>
    %28 = vector.shape_cast %27 : vector<1x8x128xf32> to vector<8x128xf32>
    %cst_16 = arith.constant 0.000000e+00 : f32
    %29 = vector.broadcast %cst_16 : f32 to vector<8x128xf32>
    %30 = arith.select %3, %28, %29 : vector<8x128xi1>, vector<8x128xf32>
    %cst_17 = arith.constant dense<0.000000e+00> : vector<8xf32>
    %31 = vector.multi_reduction <add>, %30, %cst_17 [1] : vector<8x128xf32> to vector<8xf32>
    %32 = vector.shape_cast %31 : vector<8xf32> to vector<8x1xf32>
    %33 = vector.extract_strided_slice %4 {offsets = [0, 2], sizes = [8, 1], strides = [1, 1]} : vector<8x3xf32> to vector<8x1xf32>
    %cst_18 = arith.constant 5.000000e-01 : f32
    %34 = vector.broadcast %cst_18 : f32 to vector<8x1xf32>
    %35 = arith.cmpf ogt, %33, %34 : vector<8x1xf32>
    %cst_19 = arith.constant -3.000000e+38 : f32
    %36 = vector.broadcast %cst_19 : f32 to vector<8x1xf32>
    %37 = arith.select %35, %32, %36 : vector<8x1xi1>, vector<8x1xf32>
    %c0_i32 = arith.constant 0 : i32
    %38 = vector.broadcast %c0_i32 : i32 to vector<8x1xi32>
    %39 = arith.cmpf ogt, %26, %15 : vector<8x1xf32>
    %c1_i32 = arith.constant 1 : i32
    %40 = vector.broadcast %c1_i32 : i32 to vector<8x1xi32>
    %41 = arith.select %39, %40, %38 : vector<8x1xi1>, vector<8x1xi32>
    %42 = arith.maximumf %26, %15 : vector<8x1xf32>
    %43 = arith.cmpf ogt, %37, %42 : vector<8x1xf32>
    %c2_i32 = arith.constant 2 : i32
    %44 = vector.broadcast %c2_i32 : i32 to vector<8x1xi32>
    %45 = arith.select %43, %44, %41 : vector<8x1xi1>, vector<8x1xi32>
    %c0_20 = arith.constant 0 : index
    %c0_21 = arith.constant 0 : index
    %46 = vector.load %arg5[%c0_20, %c0_21] : memref<8x1xi32, #tpu.memory_space<vmem>>, vector<8x1xi32>
    tpu.vector_store %arg5[%c0_20, %c0_21], %45 {strides = array<i32>} : memref<8x1xi32, #tpu.memory_space<vmem>>, vector<8x1xi32>,
    %c0_i32_22 = arith.constant 0 : i32
    %47 = vector.broadcast %c0_i32_22 : i32 to vector<8x1xi32>
    %48 = arith.cmpi eq, %45, %47 : vector<8x1xi32>
    %c1_i32_23 = arith.constant 1 : i32
    %49 = vector.broadcast %c1_i32_23 : i32 to vector<8x1xi32>
    %50 = arith.cmpi eq, %45, %49 : vector<8x1xi32>
    %c0_24 = arith.constant 0 : index
    %c0_25 = arith.constant 0 : index
    %c0_26 = arith.constant 0 : index
    %51 = vector.load %arg3[%c0_24, %c0_25, %c0_26] : memref<6x8x128xf32, #tpu.memory_space<vmem>>, vector<1x8x128xf32>
    %52 = vector.shape_cast %51 : vector<1x8x128xf32> to vector<8x128xf32>
    %c1 = arith.constant 1 : index
    %c0_27 = arith.constant 0 : index
    %c0_28 = arith.constant 0 : index
    %53 = vector.load %arg3[%c1, %c0_27, %c0_28] : memref<6x8x128xf32, #tpu.memory_space<vmem>>, vector<1x8x128xf32>
    %54 = vector.shape_cast %53 : vector<1x8x128xf32> to vector<8x128xf32>
    %c2 = arith.constant 2 : index
    %c0_29 = arith.constant 0 : index
    %c0_30 = arith.constant 0 : index
    %55 = vector.load %arg3[%c2, %c0_29, %c0_30] : memref<6x8x128xf32, #tpu.memory_space<vmem>>, vector<1x8x128xf32>
    %56 = vector.shape_cast %55 : vector<1x8x128xf32> to vector<8x128xf32>
    %57 = vector.shape_cast %50 : vector<8x1xi1> to vector<8x1xi1>
    %58 = vector.broadcast %57 : vector<8x1xi1> to vector<8x128xi1>
    %59 = arith.select %58, %54, %56 : vector<8x128xi1>, vector<8x128xf32>
    %60 = vector.shape_cast %48 : vector<8x1xi1> to vector<8x1xi1>
    %61 = vector.broadcast %60 : vector<8x1xi1> to vector<8x128xi1>
    %62 = arith.select %61, %52, %59 : vector<8x128xi1>, vector<8x128xf32>
    %c0_31 = arith.constant 0 : index
    %c0_32 = arith.constant 0 : index
    %c0_33 = arith.constant 0 : index
    %63 = vector.load %arg4[%c0_31, %c0_32, %c0_33] : memref<2x8x128xf32, #tpu.memory_space<vmem>>, vector<1x8x128xf32>
    %64 = vector.shape_cast %63 : vector<1x8x128xf32> to vector<8x128xf32>
    %65 = vector.shape_cast %62 : vector<8x128xf32> to vector<1x8x128xf32>
    tpu.vector_store %arg4[%c0_31, %c0_32, %c0_33], %65 {strides = array<i32>} : memref<2x8x128xf32, #tpu.memory_space<vmem>>, vector<1x8x128xf32>,
    %c3_34 = arith.constant 3 : index
    %c0_35 = arith.constant 0 : index
    %c0_36 = arith.constant 0 : index
    %66 = vector.load %arg3[%c3_34, %c0_35, %c0_36] : memref<6x8x128xf32, #tpu.memory_space<vmem>>, vector<1x8x128xf32>
    %67 = vector.shape_cast %66 : vector<1x8x128xf32> to vector<8x128xf32>
    %c4_37 = arith.constant 4 : index
    %c0_38 = arith.constant 0 : index
    %c0_39 = arith.constant 0 : index
    %68 = vector.load %arg3[%c4_37, %c0_38, %c0_39] : memref<6x8x128xf32, #tpu.memory_space<vmem>>, vector<1x8x128xf32>
    %69 = vector.shape_cast %68 : vector<1x8x128xf32> to vector<8x128xf32>
    %c5_40 = arith.constant 5 : index
    %c0_41 = arith.constant 0 : index
    %c0_42 = arith.constant 0 : index
    %70 = vector.load %arg3[%c5_40, %c0_41, %c0_42] : memref<6x8x128xf32, #tpu.memory_space<vmem>>, vector<1x8x128xf32>
    %71 = vector.shape_cast %70 : vector<1x8x128xf32> to vector<8x128xf32>
    %72 = vector.shape_cast %50 : vector<8x1xi1> to vector<8x1xi1>
    %73 = vector.broadcast %72 : vector<8x1xi1> to vector<8x128xi1>
    %74 = arith.select %73, %69, %71 : vector<8x128xi1>, vector<8x128xf32>
    %75 = vector.shape_cast %48 : vector<8x1xi1> to vector<8x1xi1>
    %76 = vector.broadcast %75 : vector<8x1xi1> to vector<8x128xi1>
    %77 = arith.select %76, %67, %74 : vector<8x128xi1>, vector<8x128xf32>
    %c1_43 = arith.constant 1 : index
    %c0_44 = arith.constant 0 : index
    %c0_45 = arith.constant 0 : index
    %78 = vector.load %arg4[%c1_43, %c0_44, %c0_45] : memref<2x8x128xf32, #tpu.memory_space<vmem>>, vector<1x8x128xf32>
    %79 = vector.shape_cast %78 : vector<1x8x128xf32> to vector<8x128xf32>
    %80 = vector.shape_cast %77 : vector<8x128xf32> to vector<1x8x128xf32>
    tpu.vector_store %arg4[%c1_43, %c0_44, %c0_45], %80 {strides = array<i32>} : memref<2x8x128xf32, #tpu.memory_space<vmem>>, vector<1x8x128xf32>,
    return
  }
  func.func @transform_0(%arg0: i32) -> (i32, i32) {
    %c0_i32 = arith.constant 0 : i32
    %c0_i32_0 = arith.constant 0 : i32
    return %arg0, %c0_i32 : i32, i32
  }
  func.func @transform_1(%arg0: i32) -> (i32, i32) {
    %c0_i32 = arith.constant 0 : i32
    %c0_i32_0 = arith.constant 0 : i32
    return %arg0, %c0_i32 : i32, i32
  }
  func.func @transform_2(%arg0: i32) -> (i32, i32, i32) {
    %c0_i32 = arith.constant 0 : i32
    %c0_i32_0 = arith.constant 0 : i32
    %c0_i32_1 = arith.constant 0 : i32
    return %c0_i32, %arg0, %c0_i32_0 : i32, i32, i32
  }
  func.func @transform_3(%arg0: i32) -> (i32, i32, i32) {
    %c0_i32 = arith.constant 0 : i32
    %c0_i32_0 = arith.constant 0 : i32
    %c0_i32_1 = arith.constant 0 : i32
    return %c0_i32, %arg0, %c0_i32_0 : i32, i32, i32
  }
  func.func @transform_4(%arg0: i32) -> (i32, i32) {
    %c0_i32 = arith.constant 0 : i32
    %c0_i32_0 = arith.constant 0 : i32
    return %arg0, %c0_i32 : i32, i32
  }
}

</mosaic_0001>

<llo_original>
// kernel: transition_select.1
$region0: #{transition_select.1}
  #allocation0 [shape = 'u32[]', space=smem, size = 0x4, offset = 0x4, fixed_abs, tag = 'smem constant byte address 0x4 - core index']
  #allocation1 [shape = 'u32[144,128]{1,0:T(1,128)}', space=vmem, size = 0x12000, scoped, tag = 'internal scratch']
  %s0 = inlined_call_operand.vmem [shape: s32[8,1], index: 0, kind: input, shape index: {}]
  %s1 = inlined_call_operand.vmem [shape: f32[8,3], index: 1, kind: input, shape index: {}]
  %s2 = inlined_call_operand.vmem [shape: f32[6,8,128], index: 2, kind: input, shape index: {}]
  %s3 = inlined_call_operand.vmem [shape: f32[2,8,128], index: 3, kind: output, shape index: {0}]
  %s4 = inlined_call_operand.vmem [shape: s32[8,1], index: 4, kind: output, shape index: {1}]
  %5 = xla_tuple %s3, %s4
  %s6 = sld [smem:[#allocation0]]
  $region30: #{transition_select.1} parent=0
    _
  %s8 = ssub.s32 1, %s6
  %s9 = scalar_select 0, %s8, %s6
  // Predicated region
  $region2: #{transition_select.1} parent=0 // pred_check
    _
  $region3: #{transition_select.1} parent=0 // pred_check_branch
    %11 = sbr.rel (0) target = $region5
  $region4: #{transition_select.1} parent=0 // pred_region
    _
  $region5: #{transition_select.1} parent=0 // pred_fallthru
    _
  // Predicated region
  $region6: #{transition_select.1} parent=0 // pred_check
    _
  $region7: #{transition_select.1} parent=0 // pred_check_branch
    %13 = sbr.rel (0) target = $region9
  $region8: #{transition_select.1} parent=0 // pred_region
    _
  $region9: #{transition_select.1} parent=0 // pred_fallthru
    _
  // Predicated region
  $region10: #{transition_select.1} parent=0 // pred_check
    _
  $region11: #{transition_select.1} parent=0 // pred_check_branch
    %15 = sbr.rel (0) target = $region13
  $region12: #{transition_select.1} parent=0 // pred_region
    _
  $region13: #{transition_select.1} parent=0 // pred_fallthru
    _
  %v16 = vld [vmem:[%s0] sm:$0xff]
  %v17 = vlaneseq
  %v18 = vand.u32 %v17, 127
  %19 = vset.pattern.permute.xlu0 0
  %20 = vperm.xlu0 %19, %v16
  %v21 = vpop.permute.xlu0 %20
  %vm22 = vcmp.eq.s32.totalorder %v18, %v21
  %v23 = vld [vmem:[%s1] sm:$0xff]
  %s24 = scalar_lea.vmem %s2, 24
  %v25 = vld [vmem:[%s24] sm:$0xff]
  %v26 = vsel %vm22, %v25, 0.0
  %27 = vadd.xlane.f32.xlu0 %v26
  %v28 = vpop.xlane.xlu0 %27
  %vm29 = vcmp.gt.f32.partialorder %v23, 0.5
  %v30 = vsel %vm29, %v28, -3e+38
  %s31 = scalar_lea.vmem %s2, 32
  %v32 = vld [vmem:[%s31] sm:$0xff]
  %v33 = vsel %vm22, %v32, 0.0
  %34 = vadd.xlane.f32.xlu0 %v33
  %v35 = vpop.xlane.xlu0 %34
  %v36 = vsel %vm29, %v35, -3e+38
  %s37 = scalar_lea.vmem %s2, 40
  %v38 = vld [vmem:[%s37] sm:$0xff]
  %v39 = vsel %vm22, %v38, 0.0
  %40 = vadd.xlane.f32.xlu0 %v39
  %v41 = vpop.xlane.xlu0 %40
  %v42 = vsel %vm29, %v41, -3e+38
  %44 = vrot.lane.b32.xlu0 %v30, 1
  %v45 = vpop.permute.xlu0 %44
  %vm47 = vcmp.gt.f32.partialorder %v36, %v45
  %v48 = vsel %vm47, 1, 0
  %v49 = vmax.f32 %v36, %v45
  %51 = vrot.lane.b32.xlu0 %v49, 1
  %v52 = vpop.permute.xlu0 %51
  %vm54 = vcmp.gt.f32.partialorder %v42, %v52
  %55 = vrot.lane.b32.xlu0 %v48, 1
  %v56 = vpop.permute.xlu0 %55
  %v57 = vsel %vm54, 2, %v56
  %58 = vrot.lane.b32.xlu0 %v57, 126
  %v59 = vpop.permute.xlu0 %58
  %vm60 = vcmask 7168
  %61 = vst.msk [vmem:[%s4] sm:$0xff] %vm60, %v59
  %vm62 = vcmp.eq.s32.totalorder %v57, 0
  %vm63 = vcmp.eq.s32.totalorder %v57, 1
  %v64 = vld [vmem:[%s2] sm:$0xff]
  %s65 = scalar_lea.vmem %s2, 8
  %v66 = vld [vmem:[%s65] sm:$0xff]
  %s67 = scalar_lea.vmem %s2, 16
  %v68 = vld [vmem:[%s67] sm:$0xff]
  %v69 = vsel %vm63, 1, 0
  %70 = vset.pattern.permute.xlu0 2
  %71 = vperm.xlu0 %70, %v69
  %v72 = vpop.permute.xlu0 %71
  %vm73 = vcmp.eq.s32.totalorder %v72, 1
  %v74 = vsel %vm73, %v66, %v68
  %v75 = vsel %vm62, 1, 0
  %76 = vset.pattern.permute.xlu0 2
  %77 = vperm.xlu0 %76, %v75
  %v78 = vpop.permute.xlu0 %77
  %vm79 = vcmp.eq.s32.totalorder %v78, 1
  %v80 = vsel %vm79, %v64, %v74
  %81 = vst [vmem:[%s3] sm:$0xff] %v80
  %v82 = vld [vmem:[%s24] sm:$0xff]
  %v83 = vld [vmem:[%s31] sm:$0xff]
  %v84 = vld [vmem:[%s37] sm:$0xff]
  %v85 = vsel %vm73, %v83, %v84
  %v86 = vsel %vm79, %v82, %v85
  %s87 = scalar_lea.vmem %s3, 8
  %88 = vst [vmem:[%s87] sm:$0xff] %v86
  // Predicated region
  $region14: #{transition_select.1} parent=0 // pred_check
    _
  $region15: #{transition_select.1} parent=0 // pred_check_branch
    %90 = sbr.rel (0) target = $region17
  $region16: #{transition_select.1} parent=0 // pred_region
    _
  $region17: #{transition_select.1} parent=0 // pred_fallthru
    _
  // Predicated region
  $region18: #{transition_select.1} parent=0 // pred_check
    _
  $region19: #{transition_select.1} parent=0 // pred_check_branch
    %92 = sbr.rel (0) target = $region21
  $region20: #{transition_select.1} parent=0 // pred_region
    _
  $region21: #{transition_select.1} parent=0 // pred_fallthru
    _
  // Predicated region
  $region22: #{transition_select.1} parent=0 // pred_check
    _
  $region23: #{transition_select.1} parent=0 // pred_check_branch
    %94 = sbr.rel (0) target = $region25
  $region24: #{transition_select.1} parent=0 // pred_region
    _
  $region25: #{transition_select.1} parent=0 // pred_fallthru
    _
  // Predicated region
  $region26: #{transition_select.1} parent=0 // pred_check
    _
  $region27: #{transition_select.1} parent=0 // pred_check_branch
    %96 = sbr.rel (0) target = $region29
  $region28: #{transition_select.1} parent=0 // pred_region
    _
  $region29: #{transition_select.1} parent=0 // pred_fallthru
    _

</llo_original>
